<compile_context>
chip_gen: v7x
topology: tpu7x:2x2x1
jax: 0.10.0
libtpu: 0.0.40
codegen_flags: <defaults>
</compile_context>

<pallas_src>
import functools

import jax
import jax.numpy as jnp
import numpy as np
from jax.experimental import pallas as pl
from jax.experimental.pallas import tpu as pltpu


def _gsq_kernel(inv_tau_ref, z_ref, e_ref, u_ref, q_ref, idx_ref, *, hard, eps):
    # Reorient to channel-major inside VMEM (XLU), never in HBM.
    z = pltpu.einshape("bcd->cbd", z_ref[...])          # (Cb, B, D) bf16/f32
    u = pltpu.einshape("bck->cbk", u_ref[...])          # (Cb, B, K) f32
    e = e_ref[...]                                      # (Cb, K, D) bf16/f32

    # logits = -clamp(||z||^2 - 2 z.e^T + ||e||^2, -5, 5), batched over channels.
    # NOTE: "cbd,ckd->cbk" contracts e's minor dim (an MXU trans_b matmul);
    # acceptable while HBM-bound.  MXU fill is low (M=B rows) -- TODO(synk):
    # add a B-blocking grid axis if B is large in production.
    z32 = z.astype(jnp.float32)
    e32 = e.astype(jnp.float32)
    x2 = jnp.sum(z32 * z32, axis=-1, keepdims=True)     # (Cb, B, 1)
    e2 = jnp.sum(e32 * e32, axis=-1)[:, None, :]        # (Cb, 1, K)
    xe = jnp.einsum("cbd,ckd->cbk", z, e,
                    preferred_element_type=jnp.float32)  # bf16 MXU, f32 acc
    logits = -jnp.clip(x2 - 2.0 * xe + e2, -5.0, 5.0)

    # Gumbel noise; the clamp of U is fused here (no separate XLA pass).
    u = jnp.clip(u, eps, 1.0 - eps)
    g = -jnp.log(-jnp.log(u))
    s = logits + g                                       # (Cb, B, K) f32

    # argmax over K with first-max tie-breaking, kept in integer domain.
    # K < 128 means these K-wide tensors use a fraction of the lanes; fine
    # while the kernel is memory-bound.
    m = jnp.max(s, axis=-1, keepdims=True)               # (Cb, B, 1)
    iota = jax.lax.broadcasted_iota(jnp.int32, s.shape, 2)
    idx = jnp.min(jnp.where(s == m, iota, jnp.int32(s.shape[-1])),
                  axis=-1)                               # (Cb, B) int32

    if hard:
        # Straight-through hard one-hot: forward value is the one-hot vector.
        gs = jnp.where(iota == idx[..., None], 1.0, 0.0)
    else:
        p = jnp.exp((s - m) * inv_tau_ref[0])
        gs = p * pl.reciprocal(jnp.sum(p, axis=-1, keepdims=True), approx=True)

    # quant = gs @ e per channel (selects / mixes codebook rows) on the MXU.
    quant = jnp.einsum("cbk,ckd->cbd", gs.astype(e.dtype), e,
                       preferred_element_type=jnp.float32)  # (Cb, B, D) f32

    q_ref[...] = pltpu.einshape("cbd->bcd", quant).astype(q_ref.dtype)
    idx_ref[0] = idx


def _vmem_capacity_bytes():
    try:
        v = int(pltpu.get_tpu_info().vmem_capacity_bytes)
        return max(32 << 20, min(v, 256 << 20))
    except Exception:
        return 64 << 20   # conservative (v7x-sized) default


def _choose_c_blk(C, B, K, D, z_itemsize, e_itemsize, vmem_bytes):
    """Pick c_blk: a divisor of C that is a multiple of 8 (or == C), whose
    double-buffered I/O tiles plus in-kernel temporaries fit in ~45% of the
    physical VMEM.  On 64 MiB (v7x, 2 TCs) parts, prefer an even block count
    so both TensorCores get work under dimension_semantics=("parallel",)."""
    k_pad = ((K + 127) // 128) * 128
    io_per_chan = (B * D * z_itemsize      # z in
                   + K * D * e_itemsize    # embedding in
                   + B * K * 4             # uniform noise in
                   + B * D * 4)            # quant out (f32)
    tmp_per_chan = (2 * B * D * 4          # f32 z copy + f32 quant temp
                    + K * D * 4            # f32 embedding copy (e2 path)
                    + 10 * B * k_pad * 4)  # K-wide temps, lane-padded
    per_chan = 2 * io_per_chan + tmp_per_chan   # 2x = double-buffered pipeline
    budget = max(per_chan, int(vmem_bytes * 0.45))
    cap = max(1, budget // per_chan)

    # (8,128) rule on the (c_blk, D)/(c_blk, K) trailing dims of the blocks.
    cands = [d for d in range(1, C + 1) if C % d == 0 and (d == C or d % 8 == 0)]
    feasible = [d for d in cands if d <= cap]
    if not feasible:
        # TODO(synk): pad C host-side to a friendly multiple instead of taking
        # the smallest legal block when even that exceeds the budget.
        feasible = [min(cands)]
    two_cores = vmem_bytes < (96 << 20)          # 64 MiB VMEM => v7x => 2 TCs
    if two_cores:
        even_nblk = [d for d in feasible if (C // d) % 2 == 0]
        if even_nblk:
            feasible = even_nblk
    return max(feasible)


def gumbel_softmax_quantizer_forward(z, embedding, tau, u, *, hard=True, eps=0.005,
                                     io_dtype=jnp.bfloat16, c_blk=None):
    """Forward pass of GumbelSoftmaxQuantizer.

    z         : (B, C, H, W) float32
    embedding : (C, K, D) float32, D == H*W
    tau       : python float temperature
    u         : (B, C, K) float32 uniform(0,1) noise (clamped in-kernel)
    io_dtype  : DMA dtype for z / embedding (bfloat16 halves HBM traffic;
                float32 gives strict parity with the f32 reference)
    Returns (q_st, commit_loss, indices) with forward values matching torch.
    """
    B, C, H, W = z.shape
    Ce, K, D = embedding.shape
    assert C == Ce and H * W == D

    # Native layouts: contiguous reshape only -- no HBM transpose passes.
    # For full benefit callers should already hold z / embedding in io_dtype;
    # otherwise the casts below are one extra (cheap, halving-write) XLA pass.
    z_bcd = z.reshape(B, C, D).astype(io_dtype)
    e_in = embedding.astype(io_dtype)
    u_in = u.astype(jnp.float32)
    inv_tau = jnp.full((1,), 1.0 / float(tau), dtype=jnp.float32)

    vmem_bytes = _vmem_capacity_bytes()
    itemsize = int(np.dtype(io_dtype).itemsize)
    if c_blk is None:
        c_blk = _choose_c_blk(C, B, K, D, itemsize, itemsize, vmem_bytes)
    assert C % c_blk == 0 and (c_blk == C or c_blk % 8 == 0)
    nblk = C // c_blk
    vmem_limit = min(vmem_bytes * 3 // 4, 100 * 1024 * 1024)

    q_bcd, idx_blk = pl.pallas_call(
        functools.partial(_gsq_kernel, hard=hard, eps=float(eps)),
        out_shape=(
            jax.ShapeDtypeStruct((B, C, D), jnp.float32),
            jax.ShapeDtypeStruct((nblk, c_blk, B), jnp.int32),
        ),
        grid=(nblk,),
        in_specs=[
            pl.BlockSpec(memory_space=pltpu.MemorySpace.SMEM),     # 1/tau scalar
            pl.BlockSpec((B, c_blk, D), lambda c: (0, c, 0)),      # z (native)
            pl.BlockSpec((c_blk, K, D), lambda c: (c, 0, 0)),      # embedding
            pl.BlockSpec((B, c_blk, K), lambda c: (0, c, 0)),      # uniform noise
        ],
        out_specs=(
            pl.BlockSpec((B, c_blk, D), lambda c: (0, c, 0)),      # quant (native)
            pl.BlockSpec((1, c_blk, B), lambda c: (c, 0, 0)),      # indices
        ),
        compiler_params=pltpu.CompilerParams(
            dimension_semantics=("parallel",),
            vmem_limit_bytes=int(vmem_limit),
        ),
    )(inv_tau, z_bcd, e_in, u_in)

    quant = q_bcd.reshape(B, C, H, W)
    q_st = quant                                   # forward value of z + (quant - z).detach()
    indices = jnp.transpose(idx_blk.reshape(C, B), (1, 0))   # (B, C), tiny
    commit_loss = jnp.float32(0.0)                 # torch module returns torch.tensor(0.0)
    # TODO(synk): straight-through gradient needs a custom_vjp; tau annealing is
    # host-side state (anneal_tau); noise could be generated in-kernel with
    # pltpu.prng_seed/prng_random_bits at the cost of bitwise reproducibility.
    return q_st, commit_loss, indices


def anneal_tau(tau, tau_min=0.2, anneal_rate=0.9996):
    return max(tau_min, tau * anneal_rate)


def _reference_forward(z, embedding, tau, u, *, hard=True, eps=0.005,
                       io_dtype=jnp.float32):
    """Pure-JAX reference mirroring the torch forward (same noise).  io_dtype
    quantizes z/embedding the same way the kernel's DMA does so index
    comparisons stay meaningful on the bf16 path."""
    B, C, H, W = z.shape
    D = H * W
    K = embedding.shape[1]
    z_q = z.reshape(B, C, D).astype(io_dtype).astype(jnp.float32)
    e_q = embedding.astype(io_dtype).astype(jnp.float32)
    x2 = jnp.sum(z_q ** 2, -1, keepdims=True)
    e2 = jnp.sum(e_q ** 2, -1)[None]
    xe = jnp.einsum("bcd,ckd->bck", z_q, e_q, precision="highest")
    logits = -jnp.clip(x2 - 2.0 * xe + e2, -5.0, 5.0)
    uu = jnp.clip(u, eps, 1.0 - eps)
    g = -jnp.log(-jnp.log(uu))
    y = jax.nn.softmax((logits + g) / tau, axis=-1)
    idx = jnp.argmax(y, -1)
    gs = jax.nn.one_hot(idx, K, dtype=jnp.float32) if hard else y
    quant = jnp.einsum("bck,ckd->bcd", gs, e_q, precision="highest").reshape(B, C, H, W)
    return quant, idx


if __name__ == "__main__":
    # Small shapes consistent with the module: B=2, C=4, H=W=16 -> D=256, K=32.
    B, C, H, W = 2, 4, 16, 16
    D, K = H * W, 32
    tau_init = 1.0

    key = jax.random.PRNGKey(0)
    k_z, k_e, k_u = jax.random.split(key, 3)
    # scale inputs so the clamped squared distance stays mostly inside [-5, 5]
    z = 0.05 * jax.random.normal(k_z, (B, C, H, W), dtype=jnp.float32)
    embedding = 0.05 * jax.random.normal(k_e, (C, K, D), dtype=jnp.float32)
    u = jax.random.uniform(k_u, (B, C, K), dtype=jnp.float32)

    # 1) f32 I/O path: strict parity with the pure-JAX f32 reference.
    q32, loss, idx32 = gumbel_softmax_quantizer_forward(
        z, embedding, tau_init, u, hard=True, eps=0.005, io_dtype=jnp.float32)
    jax.block_until_ready((q32, loss, idx32))
    q_ref, i_ref = _reference_forward(z, embedding, tau_init, u, hard=True,
                                      eps=0.005, io_dtype=jnp.float32)
    np.testing.assert_array_equal(np.asarray(idx32), np.asarray(i_ref))
    np.testing.assert_allclose(np.asarray(q32), np.asarray(q_ref), rtol=1e-4, atol=1e-5)
    assert q32.shape == (B, C, H, W) and idx32.shape == (B, C)
    assert float(loss) == 0.0

    # 2) bf16 I/O path (default, halves DMA): compare to a bf16-aware reference.
    qbf, _, idxbf = gumbel_softmax_quantizer_forward(
        z, embedding, tau_init, u, hard=True, eps=0.005)
    jax.block_until_ready((qbf, idxbf))
    q_rb, i_rb = _reference_forward(z, embedding, tau_init, u, hard=True,
                                    eps=0.005, io_dtype=jnp.bfloat16)
    np.testing.assert_array_equal(np.asarray(idxbf), np.asarray(i_rb))
    np.testing.assert_allclose(np.asarray(qbf), np.asarray(q_rb), rtol=1e-4, atol=1e-5)

    # 3) soft path: same indices, looser tolerance on quant (bf16 gs cast +
    #    approx EUP reciprocal in the softmax normalization).
    qs, _, idxs = gumbel_softmax_quantizer_forward(
        z, embedding, tau_init, u, hard=False, eps=0.005)
    jax.block_until_ready((qs, idxs))
    q_rs, i_rs = _reference_forward(z, embedding, tau_init, u, hard=False,
                                    eps=0.005, io_dtype=jnp.bfloat16)
    np.testing.assert_array_equal(np.asarray(idxs), np.asarray(i_rs))
    np.testing.assert_allclose(np.asarray(qs), np.asarray(q_rs), rtol=2e-2, atol=1e-3)

    print("KERNEL_OK")
</pallas_src>

<mosaic_0001>
module attributes {stable_mosaic.version = 11 : i64} {
  func.func @_gsq_kernel(%arg0: i32, %arg1: memref<1xf32, #tpu.memory_space<smem>>, %arg2: memref<2x4x256xf32, #tpu.memory_space<vmem>>, %arg3: memref<4x32x256xf32, #tpu.memory_space<vmem>>, %arg4: memref<2x4x32xf32, #tpu.memory_space<vmem>>, %arg5: memref<2x4x256xf32, #tpu.memory_space<vmem>>, %arg6: memref<1x4x2xi32, #tpu.memory_space<vmem>>) attributes {dimension_semantics = [#tpu.dimension_semantics<parallel>], iteration_bounds = array<i64: 1>, scalar_prefetch = 0 : i64, scratch_operands = 0 : i64, tpu.core_type = #tpu.core_type<tc>, window_params = [{transform_indices = @transform_0, window_bounds = array<i64: 1>}, {transform_indices = @transform_1, window_bounds = array<i64: 2, 4, 256>}, {transform_indices = @transform_2, window_bounds = array<i64: 4, 32, 256>}, {transform_indices = @transform_3, window_bounds = array<i64: 2, 4, 32>}, {transform_indices = @transform_4, window_bounds = array<i64: 2, 4, 256>}, {transform_indices = @transform_5, window_bounds = array<i64: 1, 4, 2>}]} {
    %c0 = arith.constant 0 : index
    %c0_0 = arith.constant 0 : index
    %c0_1 = arith.constant 0 : index
    %0 = vector.load %arg2[%c0, %c0_0, %c0_1] : memref<2x4x256xf32, #tpu.memory_space<vmem>>, vector<2x4x256xf32>
    %1 = tpu.transpose %0, [1, 0, 2] : vector<2x4x256xf32> -> vector<4x2x256xf32>
    %c0_2 = arith.constant 0 : index
    %c0_3 = arith.constant 0 : index
    %c0_4 = arith.constant 0 : index
    %2 = vector.load %arg4[%c0_2, %c0_3, %c0_4] : memref<2x4x32xf32, #tpu.memory_space<vmem>>, vector<2x4x32xf32>
    %3 = tpu.transpose %2, [1, 0, 2] : vector<2x4x32xf32> -> vector<4x2x32xf32>
    %c0_5 = arith.constant 0 : index
    %c0_6 = arith.constant 0 : index
    %c0_7 = arith.constant 0 : index
    %4 = vector.load %arg3[%c0_5, %c0_6, %c0_7] : memref<4x32x256xf32, #tpu.memory_space<vmem>>, vector<4x32x256xf32>
    %5 = arith.mulf %1, %1 : vector<4x2x256xf32>
    %cst = arith.constant dense<0.000000e+00> : vector<4x2xf32>
    %6 = vector.multi_reduction <add>, %5, %cst [2] : vector<4x2x256xf32> to vector<4x2xf32>
    %7 = vector.shape_cast %6 : vector<4x2xf32> to vector<4x2x1xf32>
    %8 = arith.mulf %4, %4 : vector<4x32x256xf32>
    %cst_8 = arith.constant dense<0.000000e+00> : vector<4x32xf32>
    %9 = vector.multi_reduction <add>, %8, %cst_8 [2] : vector<4x32x256xf32> to vector<4x32xf32>
    %10 = vector.shape_cast %9 : vector<4x32xf32> to vector<4x1x32xf32>
    "tpu.trace_start"() <{level = 10 : i32, message = "cbd,ckd->cbk"}> : () -> ()
    %cst_9 = arith.constant dense<0.000000e+00> : vector<4x2x32xf32>
    %11 = tpu.matmul %1, %4, %cst_9 {dimension_numbers = #tpu.dot_dimension_numbers<[2], [2], [1], [1], [0, 0, 0, 1, 1, 1], [0], [0]>} : vector<4x2x256xf32>, vector<4x32x256xf32>, vector<4x2x32xf32> -> vector<4x2x32xf32>
    "tpu.trace_stop"() : () -> ()
    %cst_10 = arith.constant 2.000000e+00 : f32
    %12 = vector.broadcast %cst_10 : f32 to vector<4x2x32xf32>
    %13 = arith.mulf %12, %11 : vector<4x2x32xf32>
    %14 = vector.broadcast %7 : vector<4x2x1xf32> to vector<4x2x32xf32>
    %15 = arith.subf %14, %13 : vector<4x2x32xf32>
    %16 = vector.broadcast %10 : vector<4x1x32xf32> to vector<4x2x32xf32>
    %17 = arith.addf %15, %16 : vector<4x2x32xf32>
    %cst_11 = arith.constant -5.000000e+00 : f32
    %cst_12 = arith.constant 5.000000e+00 : f32
    %18 = vector.broadcast %cst_11 : f32 to vector<4x2x32xf32>
    %19 = arith.maximumf %18, %17 : vector<4x2x32xf32>
    %20 = vector.broadcast %cst_12 : f32 to vector<4x2x32xf32>
    %21 = arith.minimumf %20, %19 : vector<4x2x32xf32>
    %cst_13 = arith.constant 0.000000e+00 : f32
    %22 = vector.broadcast %cst_13 : f32 to vector<4x2x32xf32>
    %23 = arith.subf %22, %21 : vector<4x2x32xf32>
    %cst_14 = arith.constant 5.000000e-03 : f32
    %cst_15 = arith.constant 9.950000e-01 : f32
    %24 = vector.broadcast %cst_14 : f32 to vector<4x2x32xf32>
    %25 = arith.maximumf %24, %3 : vector<4x2x32xf32>
    %26 = vector.broadcast %cst_15 : f32 to vector<4x2x32xf32>
    %27 = arith.minimumf %26, %25 : vector<4x2x32xf32>
    %28 = math.log %27 : vector<4x2x32xf32>
    %cst_16 = arith.constant 0.000000e+00 : f32
    %29 = vector.broadcast %cst_16 : f32 to vector<4x2x32xf32>
    %30 = arith.subf %29, %28 : vector<4x2x32xf32>
    %31 = math.log %30 : vector<4x2x32xf32>
    %cst_17 = arith.constant 0.000000e+00 : f32
    %32 = vector.broadcast %cst_17 : f32 to vector<4x2x32xf32>
    %33 = arith.subf %32, %31 : vector<4x2x32xf32>
    %34 = arith.addf %23, %33 : vector<4x2x32xf32>
    %cst_18 = arith.constant dense<0xFF800000> : vector<4x2xf32>
    %35 = vector.multi_reduction <maximumf>, %34, %cst_18 [2] : vector<4x2x32xf32> to vector<4x2xf32>
    %36 = vector.shape_cast %35 : vector<4x2xf32> to vector<4x2x1xf32>
    %37 = tpu.iota {dimensions = array<i32: 2>} : vector<4x2x32xi32>
    %38 = vector.broadcast %36 : vector<4x2x1xf32> to vector<4x2x32xf32>
    %39 = arith.cmpf oeq, %34, %38 : vector<4x2x32xf32>
    %c32_i32 = arith.constant 32 : i32
    %40 = vector.broadcast %c32_i32 : i32 to vector<4x2x32xi32>
    %41 = arith.select %39, %37, %40 : vector<4x2x32xi1>, vector<4x2x32xi32>
    %cst_19 = arith.constant dense<2147483647> : vector<4x2xi32>
    %42 = vector.multi_reduction <minsi>, %41, %cst_19 [2] : vector<4x2x32xi32> to vector<4x2xi32>
    %43 = vector.shape_cast %42 : vector<4x2xi32> to vector<4x2x1xi32>
    %44 = vector.broadcast %43 : vector<4x2x1xi32> to vector<4x2x32xi32>
    %45 = arith.cmpi eq, %37, %44 : vector<4x2x32xi32>
    %cst_20 = arith.constant 1.000000e+00 : f32
    %cst_21 = arith.constant 0.000000e+00 : f32
    %46 = vector.broadcast %cst_20 : f32 to vector<4x2x32xf32>
    %47 = vector.broadcast %cst_21 : f32 to vector<4x2x32xf32>
    %48 = arith.select %45, %46, %47 : vector<4x2x32xi1>, vector<4x2x32xf32>
    "tpu.trace_start"() <{level = 10 : i32, message = "cbk,ckd->cbd"}> : () -> ()
    %cst_22 = arith.constant dense<0.000000e+00> : vector<4x2x256xf32>
    %49 = tpu.matmul %48, %4, %cst_22 {dimension_numbers = #tpu.dot_dimension_numbers<[2], [1], [1], [2], [0, 0, 0, 1, 1, 2], [0], [0]>} : vector<4x2x32xf32>, vector<4x32x256xf32>, vector<4x2x256xf32> -> vector<4x2x256xf32>
    "tpu.trace_stop"() : () -> ()
    %50 = tpu.transpose %49, [1, 0, 2] : vector<4x2x256xf32> -> vector<2x4x256xf32>
    %c0_23 = arith.constant 0 : index
    %c0_24 = arith.constant 0 : index
    %c0_25 = arith.constant 0 : index
    %51 = vector.load %arg5[%c0_23, %c0_24, %c0_25] : memref<2x4x256xf32, #tpu.memory_space<vmem>>, vector<2x4x256xf32>
    tpu.vector_store %arg5[%c0_23, %c0_24, %c0_25], %50 {strides = array<i32>} : memref<2x4x256xf32, #tpu.memory_space<vmem>>, vector<2x4x256xf32>,
    %c0_26 = arith.constant 0 : index
    %c0_27 = arith.constant 0 : index
    %c0_28 = arith.constant 0 : index
    %52 = vector.load %arg6[%c0_26, %c0_27, %c0_28] : memref<1x4x2xi32, #tpu.memory_space<vmem>>, vector<1x4x2xi32>
    %53 = vector.shape_cast %52 : vector<1x4x2xi32> to vector<4x2xi32>
    %54 = vector.shape_cast %42 : vector<4x2xi32> to vector<1x4x2xi32>
    tpu.vector_store %arg6[%c0_26, %c0_27, %c0_28], %54 {strides = array<i32>} : memref<1x4x2xi32, #tpu.memory_space<vmem>>, vector<1x4x2xi32>,
    return
  }
  func.func @transform_0(%arg0: i32) -> i32 {
    %c0_i32 = arith.constant 0 : i32
    %c0_i32_0 = arith.constant 0 : i32
    return %c0_i32 : i32
  }
  func.func @transform_1(%arg0: i32) -> (i32, i32, i32) {
    %c0_i32 = arith.constant 0 : i32
    %c0_i32_0 = arith.constant 0 : i32
    %c0_i32_1 = arith.constant 0 : i32
    return %c0_i32, %arg0, %c0_i32_0 : i32, i32, i32
  }
  func.func @transform_2(%arg0: i32) -> (i32, i32, i32) {
    %c0_i32 = arith.constant 0 : i32
    %c0_i32_0 = arith.constant 0 : i32
    %c0_i32_1 = arith.constant 0 : i32
    return %arg0, %c0_i32, %c0_i32_0 : i32, i32, i32
  }
  func.func @transform_3(%arg0: i32) -> (i32, i32, i32) {
    %c0_i32 = arith.constant 0 : i32
    %c0_i32_0 = arith.constant 0 : i32
    %c0_i32_1 = arith.constant 0 : i32
    return %c0_i32, %arg0, %c0_i32_0 : i32, i32, i32
  }
  func.func @transform_4(%arg0: i32) -> (i32, i32, i32) {
    %c0_i32 = arith.constant 0 : i32
    %c0_i32_0 = arith.constant 0 : i32
    %c0_i32_1 = arith.constant 0 : i32
    return %c0_i32, %arg0, %c0_i32_0 : i32, i32, i32
  }
  func.func @transform_5(%arg0: i32) -> (i32, i32, i32) {
    %c0_i32 = arith.constant 0 : i32
    %c0_i32_0 = arith.constant 0 : i32
    %c0_i32_1 = arith.constant 0 : i32
    return %arg0, %c0_i32, %c0_i32_0 : i32, i32, i32
  }
}

</mosaic_0001>

<llo_original>
// kernel: tpu_custom_call.1
$region0: #{tpu_custom_call.1}
  #allocation0 [shape = 'u32[]', space=smem, size = 0x4, offset = 0x4, fixed_abs, tag = 'smem constant byte address 0x4 - core index']
  #allocation1 [shape = 'u32[144,128]{1,0:T(1,128)}', space=vmem, size = 0x12000, scoped, tag = 'internal scratch']
  #allocation2 [shape = 'f32[1]{0:T(128)S(6)}', space=smem, size = 0x200, scoped, tag = 'scoped memory for tpu_custom_call.1']
  %s0 = inlined_call_operand.<no memory space> [shape: f32[1], index: 0, kind: input, shape index: {}]
  %s1 = inlined_call_operand.hbm [shape: f32[2,4,256], index: 1, kind: input, shape index: {}]
  %s2 = inlined_call_operand.hbm [shape: f32[4,32,256], index: 2, kind: input, shape index: {}]
  %s3 = inlined_call_operand.vmem [shape: f32[2,4,32], index: 3, kind: input, shape index: {}]
  %s4 = inlined_call_operand.hbm [shape: f32[2,4,256], index: 4, kind: output, shape index: {0}]
  %s5 = inlined_call_operand.vmem [shape: s32[1,4,2], index: 5, kind: output, shape index: {1}]
  %6 = xla_tuple %s4, %s5
  %s7 = sld [smem:[#allocation0]]
  $region42: #{tpu_custom_call.1} parent=0
    _
  %s9 = ssub.s32 1, %s7
  %s10 = scalar_select 0, %s9, %s7
  %11 = sst [smem:[#allocation2]] %s0
  $region1: #{tpu_custom_call.1} parent=0
    #allocation3 [shape = 'u8[8192]{0}', space=vmem, size = 0x2000, scoped, tag = 'input window, operand 1, single buffered']
    #allocation4 [shape = 's32[1]{0}', space=sflag, size = 0x4, scoped, tag = 'scoped memory for tpu_custom_call.1']
    #allocation5 [shape = 's32[1]{0}', space=sflag, size = 0x4, scoped, tag = 'scoped memory for tpu_custom_call.1']
    #allocation6 [shape = 'u8[131072]{0}', space=vmem, size = 0x20000, scoped, tag = 'input window, operand 2, single buffered']
    #allocation7 [shape = 's32[1]{0}', space=sflag, size = 0x4, scoped, tag = 'scoped memory for tpu_custom_call.1']
    #allocation8 [shape = 'u8[8192]{0}', space=vmem, size = 0x2000, scoped, tag = 'output window, operand 0, single buffered']
    %12 = vsyncpa [#allocation4], 0
    %13 = vsyncpa [#allocation7], 0
    %14 = vsyncpa [#allocation5], 0
    // Predicated region
    $region2: #{tpu_custom_call.1} parent=1 // pred_check
      _
    $region3: #{tpu_custom_call.1} parent=1 // pred_check_branch
      %16 = sbr.rel (0) target = $region5
    $region4: #{tpu_custom_call.1} parent=1 // pred_region
      _
    $region5: #{tpu_custom_call.1} parent=1 // pred_fallthru
      _
    // Predicated region
    $region6: #{tpu_custom_call.1} parent=1 // pred_check
      _
    $region7: #{tpu_custom_call.1} parent=1 // pred_check_branch
      %18 = sbr.rel (0) target = $region9
    $region8: #{tpu_custom_call.1} parent=1 // pred_region
      %s20 = ssub.s32 256, 256
      %21 = vsyncadd [#allocation4], %s20
      %s22 = sshll.u32 [#allocation3], 4
      %s23 = int_to_ptr.vmem [resolvable:$true] %s22
      %28 = dma.hbm_to_vmem [thread:$0]  %s1, 256, %s23, [#allocation4], 128, 128, 8
    $region9: #{tpu_custom_call.1} parent=1 // pred_fallthru
      _
    // Predicated region
    $region10: #{tpu_custom_call.1} parent=1 // pred_check
      _
    $region11: #{tpu_custom_call.1} parent=1 // pred_check_branch
      %30 = sbr.rel (0) target = $region13
    $region12: #{tpu_custom_call.1} parent=1 // pred_region
      %s32 = ssub.s32 4096, 4096
      %33 = vsyncadd [#allocation7], %s32
      %s34 = sshll.u32 [#allocation6], 4
      %s35 = int_to_ptr.vmem [resolvable:$true] %s34
      %40 = dma.hbm_to_vmem [thread:$0]  %s2, 4096, %s35, [#allocation7], 256, 256, 16
    $region13: #{tpu_custom_call.1} parent=1 // pred_fallthru
      _
    // Predicated region
    $region14: #{tpu_custom_call.1} parent=1 // pred_check
      _
    $region15: #{tpu_custom_call.1} parent=1 // pred_check_branch
      %42 = sbr.rel (0) target = $region17
    $region16: #{tpu_custom_call.1} parent=1 // pred_region
      _
    $region17: #{tpu_custom_call.1} parent=1 // pred_fallthru
      _
    // Predicated region
    $region18: #{tpu_custom_call.1} parent=1 // pred_check
      _
    $region19: #{tpu_custom_call.1} parent=1 // pred_check_branch
      %44 = sbr.rel (0) target = $region21
    $region20: #{tpu_custom_call.1} parent=1 // pred_region
      %45 = dma.done [#allocation4], 256
    $region21: #{tpu_custom_call.1} parent=1 // pred_fallthru
      _
    // Predicated region
    $region22: #{tpu_custom_call.1} parent=1 // pred_check
      _
    $region23: #{tpu_custom_call.1} parent=1 // pred_check_branch
      %47 = sbr.rel (0) target = $region25
    $region24: #{tpu_custom_call.1} parent=1 // pred_region
      %48 = dma.done [#allocation7], 4096
    $region25: #{tpu_custom_call.1} parent=1 // pred_fallthru
      _
    %v49 = vld [vmem:[#allocation3] sm:$0xff]
    %v50 = vld [vmem:[#allocation3 + $0x8] sm:$0xff]
    %v51 = vcombine.high %v49, 0.0
    %v53 = vunpack.c.l.s4 1983009808
    %v54 = vunpack.c.0.s8 %v53
    %v55 = vlaneseq
    %v56 = vshrl.u32 %v55, 7
    %v57 = vsub.s32 %v54, %v56
    %v58 = vrot.slane %v49, %v57
    %v60 = vunpack.c.l.s4 1983009808
    %v61 = vunpack.c.0.s8 %v60
    %v62 = vlaneseq
    %v63 = vshrl.u32 %v62, 7
    %v64 = vsub.s32 %v61, %v63
    %v65 = vrot.slane %v51, %v64
    %v66 = vcombine.high %v50, 0.0
    %v68 = vunpack.c.l.s4 1983009808
    %v69 = vunpack.c.0.s8 %v68
    %v70 = vlaneseq
    %v71 = vshrl.u32 %v70, 7
    %v72 = vsub.s32 %v69, %v71
    %v73 = vrot.slane %v50, %v72
    %v75 = vunpack.c.l.s4 1983009808
    %v76 = vunpack.c.0.s8 %v75
    %v77 = vlaneseq
    %v78 = vshrl.u32 %v77, 7
    %v79 = vsub.s32 %v76, %v78
    %v80 = vrot.slane %v66, %v79
    %v81 = vcombine.low %v58, %v73
    %v82 = vcombine.high %v58, %v73
    %v84 = vunpack.c.l.s4 1934713408
    %v85 = vunpack.c.0.s8 %v84
    %v86 = vlaneseq
    %v87 = vshrl.u32 %v86, 7
    %v88 = vsub.s32 %v85, %v87
    %v89 = vrot.slane %v81, %v88
    %v91 = vunpack.c.l.s4 1934713408
    %v92 = vunpack.c.0.s8 %v91
    %v93 = vlaneseq
    %v94 = vshrl.u32 %v93, 7
    %v95 = vsub.s32 %v92, %v94
    %v96 = vrot.slane %v82, %v95
    %v97 = vcombine.low %v65, %v80
    %v98 = vcombine.high %v65, %v80
    %v100 = vunpack.c.l.s4 1934713408
    %v101 = vunpack.c.0.s8 %v100
    %v102 = vlaneseq
    %v103 = vshrl.u32 %v102, 7
    %v104 = vsub.s32 %v101, %v103
    %v105 = vrot.slane %v97, %v104
    %v107 = vunpack.c.l.s4 1934713408
    %v108 = vunpack.c.0.s8 %v107
    %v109 = vlaneseq
    %v110 = vshrl.u32 %v109, 7
    %v111 = vsub.s32 %v108, %v110
    %v112 = vrot.slane %v98, %v111
    %v113 = vcombine.low %v89, %v105
    %v114 = vcombine.high %v89, %v105
    %v115 = vcombine.low %v96, %v112
    %v116 = vcombine.high %v96, %v112
    %v117 = vld [vmem:[%s3] sm:$0xf]
    %v119 = vunpack.c.l.s4 1983009808
    %v120 = vunpack.c.0.s8 %v119
    %v121 = vlaneseq
    %v122 = vshrl.u32 %v121, 7
    %v123 = vsub.s32 %v120, %v122
    %v124 = vrot.slane %v117, %v123
    %v125 = vld [vmem:[%s3 + $0x4] sm:$0xf]
    %v127 = vunpack.c.l.s4 1983009808
    %v128 = vunpack.c.0.s8 %v127
    %v129 = vlaneseq
    %v130 = vshrl.u32 %v129, 7
    %v131 = vsub.s32 %v128, %v130
    %v132 = vrot.slane %v125, %v131
    %v133 = vcombine.low %v124, %v132
    %v134 = vcombine.high %v124, %v132
    %v136 = vunpack.c.l.s4 1934713408
    %v137 = vunpack.c.0.s8 %v136
    %v138 = vlaneseq
    %v139 = vshrl.u32 %v138, 7
    %v140 = vsub.s32 %v137, %v139
    %v141 = vrot.slane %v133, %v140
    %v143 = vunpack.c.l.s4 1934713408
    %v144 = vunpack.c.0.s8 %v143
    %v145 = vlaneseq
    %v146 = vshrl.u32 %v145, 7
    %v147 = vsub.s32 %v144, %v146
    %v148 = vrot.slane %v134, %v147
    %v149 = vcombine.high %v141, 0.0
    %v150 = vcombine.high %v148, 0.0
    %v151 = vld [vmem:[#allocation6] sm:$0xff]
    %v152 = vld [vmem:[#allocation6 + $0x8] sm:$0xff]
    %v153 = vld [vmem:[#allocation6 + $0x10] sm:$0xff]
    %v154 = vld [vmem:[#allocation6 + $0x18] sm:$0xff]
    %v155 = vld [vmem:[#allocation6 + $0x20] sm:$0xff]
    %v156 = vld [vmem:[#allocation6 + $0x28] sm:$0xff]
    %v157 = vld [vmem:[#allocation6 + $0x30] sm:$0xff]
    %v158 = vld [vmem:[#allocation6 + $0x38] sm:$0xff]
    %v159 = vld [vmem:[#allocation6 + $0x40] sm:$0xff]
    %v160 = vld [vmem:[#allocation6 + $0x48] sm:$0xff]
    %v161 = vld [vmem:[#allocation6 + $0x50] sm:$0xff]
    %v162 = vld [vmem:[#allocation6 + $0x58] sm:$0xff]
    %v163 = vld [vmem:[#allocation6 + $0x60] sm:$0xff]
    %v164 = vld [vmem:[#allocation6 + $0x68] sm:$0xff]
    %v165 = vld [vmem:[#allocation6 + $0x70] sm:$0xff]
    %v166 = vld [vmem:[#allocation6 + $0x78] sm:$0xff]
    %v167 = vld [vmem:[#allocation6 + $0x80] sm:$0xff]
    %v168 = vld [vmem:[#allocation6 + $0x88] sm:$0xff]
    %v169 = vld [vmem:[#allocation6 + $0x90] sm:$0xff]
    %v170 = vld [vmem:[#allocation6 + $0x98] sm:$0xff]
    %v171 = vld [vmem:[#allocation6 + $0xa0] sm:$0xff]
    %v172 = vld [vmem:[#allocation6 + $0xa8] sm:$0xff]
    %v173 = vld [vmem:[#allocation6 + $0xb0] sm:$0xff]
    %v174 = vld [vmem:[#allocation6 + $0xb8] sm:$0xff]
    %v175 = vld [vmem:[#allocation6 + $0xc0] sm:$0xff]
    %v176 = vld [vmem:[#allocation6 + $0xc8] sm:$0xff]
    %v177 = vld [vmem:[#allocation6 + $0xd0] sm:$0xff]
    %v178 = vld [vmem:[#allocation6 + $0xd8] sm:$0xff]
    %v179 = vld [vmem:[#allocation6 + $0xe0] sm:$0xff]
    %v180 = vld [vmem:[#allocation6 + $0xe8] sm:$0xff]
    %v181 = vld [vmem:[#allocation6 + $0xf0] sm:$0xff]
    %v182 = vld [vmem:[#allocation6 + $0xf8] sm:$0xff]
    %v183 = vmul.f32 %v113, %v113
    %v184 = vmul.f32 %v114, %v114
    %v185 = vmul.f32 %v115, %v115
    %v186 = vmul.f32 %v116, %v116
    %v191 = vcombine.high %v183, %v183
    %v192 = vcombine.high %v184, %v184
    %v193 = vcombine.high %v185, %v185
    %v194 = vcombine.high %v186, %v186
    %vm199 = vcmask 1041408
    %v200 = vsel %vm199, %v183, 0.0
    %v201 = vsel %vm199, %v191, 0.0
    %v202 = vadd.f32 %v200, %v201
    %203 = vadd.xlane.f32.xlu0 %v202
    %v204 = vpop.xlane.xlu0 %203
    %v205 = vsel %vm199, %v184, 0.0
    %v206 = vsel %vm199, %v192, 0.0
    %v207 = vadd.f32 %v205, %v206
    %208 = vadd.xlane.f32.xlu0 %v207
    %v209 = vpop.xlane.xlu0 %208
    %v210 = vsel %vm199, %v185, 0.0
    %v211 = vsel %vm199, %v193, 0.0
    %v212 = vadd.f32 %v210, %v211
    %213 = vadd.xlane.f32.xlu0 %v212
    %v214 = vpop.xlane.xlu0 %213
    %v215 = vsel %vm199, %v186, 0.0
    %v216 = vsel %vm199, %v194, 0.0
    %v217 = vadd.f32 %v215, %v216
    %218 = vadd.xlane.f32.xlu0 %v217
    %v219 = vpop.xlane.xlu0 %218
    %v220 = vmul.f32 %v151, %v151
    %v221 = vmul.f32 %v152, %v152
    %v222 = vmul.f32 %v153, %v153
    %v223 = vmul.f32 %v154, %v154
    %v224 = vmul.f32 %v155, %v155
    %v225 = vmul.f32 %v156, %v156
    %v226 = vmul.f32 %v157, %v157
    %v227 = vmul.f32 %v158, %v158
    %v228 = vmul.f32 %v159, %v159
    %v229 = vmul.f32 %v160, %v160
    %v230 = vmul.f32 %v161, %v161
    %v231 = vmul.f32 %v162, %v162
    %v232 = vmul.f32 %v163, %v163
    %v233 = vmul.f32 %v164, %v164
    %v234 = vmul.f32 %v165, %v165
    %v235 = vmul.f32 %v166, %v166
    %v236 = vmul.f32 %v167, %v167
    %v237 = vmul.f32 %v168, %v168
    %v238 = vmul.f32 %v169, %v169
    %v239 = vmul.f32 %v170, %v170
    %v240 = vmul.f32 %v171, %v171
    %v241 = vmul.f32 %v172, %v172
    %v242 = vmul.f32 %v173, %v173
    %v243 = vmul.f32 %v174, %v174
    %v244 = vmul.f32 %v175, %v175
    %v245 = vmul.f32 %v176, %v176
    %v246 = vmul.f32 %v177, %v177
    %v247 = vmul.f32 %v178, %v178
    %v248 = vmul.f32 %v179, %v179
    %v249 = vmul.f32 %v180, %v180
    %v250 = vmul.f32 %v181, %v181
    %v251 = vmul.f32 %v182, %v182
    %v252 = vadd.f32 %v220, %v221
    %253 = vadd.xlane.f32.xlu0 %v252
    %v254 = vpop.xlane.xlu0 %253
    %v255 = vadd.f32 %v222, %v223
    %256 = vadd.xlane.f32.xlu0 %v255
    %v257 = vpop.xlane.xlu0 %256
    %v258 = vadd.f32 %v224, %v225
    %259 = vadd.xlane.f32.xlu0 %v258
    %v260 = vpop.xlane.xlu0 %259
    %v261 = vadd.f32 %v226, %v227
    %262 = vadd.xlane.f32.xlu0 %v261
    %v263 = vpop.xlane.xlu0 %262
    %v264 = vadd.f32 %v228, %v229
    %265 = vadd.xlane.f32.xlu0 %v264
    %v266 = vpop.xlane.xlu0 %265
    %v267 = vadd.f32 %v230, %v231
    %268 = vadd.xlane.f32.xlu0 %v267
    %v269 = vpop.xlane.xlu0 %268
    %v270 = vadd.f32 %v232, %v233
    %271 = vadd.xlane.f32.xlu0 %v270
    %v272 = vpop.xlane.xlu0 %271
    %v273 = vadd.f32 %v234, %v235
    %274 = vadd.xlane.f32.xlu0 %v273
    %v275 = vpop.xlane.xlu0 %274
    %v276 = vadd.f32 %v236, %v237
    %277 = vadd.xlane.f32.xlu0 %v276
    %v278 = vpop.xlane.xlu0 %277
    %v279 = vadd.f32 %v238, %v239
    %280 = vadd.xlane.f32.xlu0 %v279
    %v281 = vpop.xlane.xlu0 %280
    %v282 = vadd.f32 %v240, %v241
    %283 = vadd.xlane.f32.xlu0 %v282
    %v284 = vpop.xlane.xlu0 %283
    %v285 = vadd.f32 %v242, %v243
    %286 = vadd.xlane.f32.xlu0 %v285
    %v287 = vpop.xlane.xlu0 %286
    %v288 = vadd.f32 %v244, %v245
    %289 = vadd.xlane.f32.xlu0 %v288
    %v290 = vpop.xlane.xlu0 %289
    %v291 = vadd.f32 %v246, %v247
    %292 = vadd.xlane.f32.xlu0 %v291
    %v293 = vpop.xlane.xlu0 %292
    %v294 = vadd.f32 %v248, %v249
    %295 = vadd.xlane.f32.xlu0 %v294
    %v296 = vpop.xlane.xlu0 %295
    %v297 = vadd.f32 %v250, %v251
    %298 = vadd.xlane.f32.xlu0 %v297
    %v299 = vpop.xlane.xlu0 %298
    %v301 = vcombine.high %v113, %v113
    %303 = vmatprep.subr.mxu0 %v152
    %304 = vmatpush1.xpose.msra.mxu0 %v151
    %305 = vmatprep.subr.mxu0 %v154
    %306 = vmatpush1.xpose.msra.mxu0 %v153
    %307 = vmatprep.subr.mxu0 %v156
    %308 = vmatpush1.xpose.msra.mxu0 %v155
    %309 = vmatprep.subr.mxu0 %v158
    %310 = vmatpush1.xpose.msra.mxu0 %v157
    %311 = vmatprep.subr.mxu0 0.0
    %312 = vmatpush1.xpose.msra.mxu0 0.0
    %313 = vmatprep.subr.mxu0 0.0
    %314 = vmatpush1.xpose.msra.mxu0 0.0
    %315 = vmatprep.subr.mxu0 0.0
    %316 = vmatpush1.xpose.msra.mxu0 0.0
    %317 = vmatprep.subr.mxu0 0.0
    %318 = vmatpush1.xpose.msra.mxu0 0.0
    %319 = vmatprep.subr.mxu0 0.0
    %320 = vmatpush1.xpose.msra.mxu0 0.0
    %321 = vmatprep.subr.mxu0 0.0
    %322 = vmatpush1.xpose.msra.mxu0 0.0
    %323 = vmatprep.subr.mxu0 0.0
    %324 = vmatpush1.xpose.msra.mxu0 0.0
    %325 = vmatprep.subr.mxu0 0.0
    %326 = vmatpush1.xpose.msra.mxu0 0.0
    %327 = vmatprep.subr.mxu0 0.0
    %328 = vmatpush1.xpose.msra.mxu0 0.0
    %329 = vmatprep.subr.mxu0 0.0
    %330 = vmatpush1.xpose.msra.mxu0 0.0
    %331 = vmatprep.subr.mxu0 0.0
    %332 = vmatpush1.xpose.msra.mxu0 0.0
    %333 = vmatprep.subr.mxu0 0.0
    %334 = vmatpush1.xpose.msra.mxu0 0.0
    %335 = vmatprep.subr.mxu0 0.0
    %336 = vmatpush1.xpose.msra.mxu0 0.0
    %337 = vmatprep.subr.mxu0 0.0
    %338 = vmatpush1.xpose.msra.mxu0 0.0
    %339 = vmatprep.subr.mxu0 0.0
    %340 = vmatpush1.xpose.msra.mxu0 0.0
    %341 = vmatprep.subr.mxu0 0.0
    %342 = vmatpush1.xpose.msra.mxu0 0.0
    %343 = vmatprep.subr.mxu0 0.0
    %344 = vmatpush1.xpose.msra.mxu0 0.0
    %345 = vmatprep.subr.mxu0 0.0
    %346 = vmatpush1.xpose.msra.mxu0 0.0
    %347 = vmatprep.subr.mxu0 0.0
    %348 = vmatpush1.xpose.msra.mxu0 0.0
    %349 = vmatprep.subr.mxu0 0.0
    %350 = vmatpush1.xpose.msra.mxu0 0.0
    %351 = vmatprep.subr.mxu0 0.0
    %352 = vmatpush1.xpose.msra.mxu0 0.0
    %353 = vmatprep.subr.mxu0 0.0
    %354 = vmatpush1.xpose.msra.mxu0 0.0
    %355 = vmatprep.subr.mxu0 0.0
    %356 = vmatpush1.xpose.msra.mxu0 0.0
    %357 = vmatprep.subr.mxu0 0.0
    %358 = vmatpush1.xpose.msra.mxu0 0.0
    %359 = vmatprep.subr.mxu0 0.0
    %360 = vmatpush1.xpose.msra.mxu0 0.0
    %361 = vmatprep.subr.mxu0 0.0
    %362 = vmatpush1.xpose.msra.mxu0 0.0
    %363 = vmatprep.subr.mxu0 0.0
    %364 = vmatpush1.xpose.msra.mxu0 0.0
    %365 = vmatprep.subr.mxu0 0.0
    %366 = vmatpush1.xpose.msra.mxu0 0.0
    %367 = vmatprep.mubr.f32.mxu0 %v301
    %368 = vmatmul.mubr.f32.gmra.mrb[0].mxu0 %v113
    %v369 = vpop.f32.mrb[0].mxu0
    %v370 = vadd.f32 0.0, %v369
    %v371 = vpop.f32.mrb[0].mxu0
    %372 = vdwg.mxu0
    %v374 = vcombine.high %v114, %v114
    %376 = vmatprep.subr.mxu0 %v160
    %377 = vmatpush1.xpose.msra.mxu0 %v159
    %378 = vmatprep.subr.mxu0 %v162
    %379 = vmatpush1.xpose.msra.mxu0 %v161
    %380 = vmatprep.subr.mxu0 %v164
    %381 = vmatpush1.xpose.msra.mxu0 %v163
    %382 = vmatprep.subr.mxu0 %v166
    %383 = vmatpush1.xpose.msra.mxu0 %v165
    %384 = vmatprep.subr.mxu0 0.0
    %385 = vmatpush1.xpose.msra.mxu0 0.0
    %386 = vmatprep.subr.mxu0 0.0
    %387 = vmatpush1.xpose.msra.mxu0 0.0
    %388 = vmatprep.subr.mxu0 0.0
    %389 = vmatpush1.xpose.msra.mxu0 0.0
    %390 = vmatprep.subr.mxu0 0.0
    %391 = vmatpush1.xpose.msra.mxu0 0.0
    %392 = vmatprep.subr.mxu0 0.0
    %393 = vmatpush1.xpose.msra.mxu0 0.0
    %394 = vmatprep.subr.mxu0 0.0
    %395 = vmatpush1.xpose.msra.mxu0 0.0
    %396 = vmatprep.subr.mxu0 0.0
    %397 = vmatpush1.xpose.msra.mxu0 0.0
    %398 = vmatprep.subr.mxu0 0.0
    %399 = vmatpush1.xpose.msra.mxu0 0.0
    %400 = vmatprep.subr.mxu0 0.0
    %401 = vmatpush1.xpose.msra.mxu0 0.0
    %402 = vmatprep.subr.mxu0 0.0
    %403 = vmatpush1.xpose.msra.mxu0 0.0
    %404 = vmatprep.subr.mxu0 0.0
    %405 = vmatpush1.xpose.msra.mxu0 0.0
    %406 = vmatprep.subr.mxu0 0.0
    %407 = vmatpush1.xpose.msra.mxu0 0.0
    %408 = vmatprep.subr.mxu0 0.0
    %409 = vmatpush1.xpose.msra.mxu0 0.0
    %410 = vmatprep.subr.mxu0 0.0
    %411 = vmatpush1.xpose.msra.mxu0 0.0
    %412 = vmatprep.subr.mxu0 0.0
    %413 = vmatpush1.xpose.msra.mxu0 0.0
    %414 = vmatprep.subr.mxu0 0.0
    %415 = vmatpush1.xpose.msra.mxu0 0.0
    %416 = vmatprep.subr.mxu0 0.0
    %417 = vmatpush1.xpose.msra.mxu0 0.0
    %418 = vmatprep.subr.mxu0 0.0
    %419 = vmatpush1.xpose.msra.mxu0 0.0
    %420 = vmatprep.subr.mxu0 0.0
    %421 = vmatpush1.xpose.msra.mxu0 0.0
    %422 = vmatprep.subr.mxu0 0.0
    %423 = vmatpush1.xpose.msra.mxu0 0.0
    %424 = vmatprep.subr.mxu0 0.0
    %425 = vmatpush1.xpose.msra.mxu0 0.0
    %426 = vmatprep.subr.mxu0 0.0
    %427 = vmatpush1.xpose.msra.mxu0 0.0
    %428 = vmatprep.subr.mxu0 0.0
    %429 = vmatpush1.xpose.msra.mxu0 0.0
    %430 = vmatprep.subr.mxu0 0.0
    %431 = vmatpush1.xpose.msra.mxu0 0.0
    %432 = vmatprep.subr.mxu0 0.0
    %433 = vmatpush1.xpose.msra.mxu0 0.0
    %434 = vmatprep.subr.mxu0 0.0
    %435 = vmatpush1.xpose.msra.mxu0 0.0
    %436 = vmatprep.subr.mxu0 0.0
    %437 = vmatpush1.xpose.msra.mxu0 0.0
    %438 = vmatprep.subr.mxu0 0.0
    %439 = vmatpush1.xpose.msra.mxu0 0.0
    %440 = vmatprep.mubr.f32.mxu0 %v374
    %441 = vmatmul.mubr.f32.gmra.mrb[0].mxu0 %v114
    %v442 = vpop.f32.mrb[0].mxu0
    %v443 = vadd.f32 0.0, %v442
    %v444 = vpop.f32.mrb[0].mxu0
    %445 = vdwg.mxu0
    %v447 = vcombine.high %v115, %v115
    %449 = vmatprep.subr.mxu0 %v168
    %450 = vmatpush1.xpose.msra.mxu0 %v167
    %451 = vmatprep.subr.mxu0 %v170
    %452 = vmatpush1.xpose.msra.mxu0 %v169
    %453 = vmatprep.subr.mxu0 %v172
    %454 = vmatpush1.xpose.msra.mxu0 %v171
    %455 = vmatprep.subr.mxu0 %v174
    %456 = vmatpush1.xpose.msra.mxu0 %v173
    %457 = vmatprep.subr.mxu0 0.0
    %458 = vmatpush1.xpose.msra.mxu0 0.0
    %459 = vmatprep.subr.mxu0 0.0
    %460 = vmatpush1.xpose.msra.mxu0 0.0
    %461 = vmatprep.subr.mxu0 0.0
    %462 = vmatpush1.xpose.msra.mxu0 0.0
    %463 = vmatprep.subr.mxu0 0.0
    %464 = vmatpush1.xpose.msra.mxu0 0.0
    %465 = vmatprep.subr.mxu0 0.0
    %466 = vmatpush1.xpose.msra.mxu0 0.0
    %467 = vmatprep.subr.mxu0 0.0
    %468 = vmatpush1.xpose.msra.mxu0 0.0
    %469 = vmatprep.subr.mxu0 0.0
    %470 = vmatpush1.xpose.msra.mxu0 0.0
    %471 = vmatprep.subr.mxu0 0.0
    %472 = vmatpush1.xpose.msra.mxu0 0.0
    %473 = vmatprep.subr.mxu0 0.0
    %474 = vmatpush1.xpose.msra.mxu0 0.0
    %475 = vmatprep.subr.mxu0 0.0
    %476 = vmatpush1.xpose.msra.mxu0 0.0
    %477 = vmatprep.subr.mxu0 0.0
    %478 = vmatpush1.xpose.msra.mxu0 0.0
    %479 = vmatprep.subr.mxu0 0.0
    %480 = vmatpush1.xpose.msra.mxu0 0.0
    %481 = vmatprep.subr.mxu0 0.0
    %482 = vmatpush1.xpose.msra.mxu0 0.0
    %483 = vmatprep.subr.mxu0 0.0
    %484 = vmatpush1.xpose.msra.mxu0 0.0
    %485 = vmatprep.subr.mxu0 0.0
    %486 = vmatpush1.xpose.msra.mxu0 0.0
    %487 = vmatprep.subr.mxu0 0.0
    %488 = vmatpush1.xpose.msra.mxu0 0.0
    %489 = vmatprep.subr.mxu0 0.0
    %490 = vmatpush1.xpose.msra.mxu0 0.0
    %491 = vmatprep.subr.mxu0 0.0
    %492 = vmatpush1.xpose.msra.mxu0 0.0
    %493 = vmatprep.subr.mxu0 0.0
    %494 = vmatpush1.xpose.msra.mxu0 0.0
    %495 = vmatprep.subr.mxu0 0.0
    %496 = vmatpush1.xpose.msra.mxu0 0.0
    %497 = vmatprep.subr.mxu0 0.0
    %498 = vmatpush1.xpose.msra.mxu0 0.0
    %499 = vmatprep.subr.mxu0 0.0
    %500 = vmatpush1.xpose.msra.mxu0 0.0
    %501 = vmatprep.subr.mxu0 0.0
    %502 = vmatpush1.xpose.msra.mxu0 0.0
    %503 = vmatprep.subr.mxu0 0.0
    %504 = vmatpush1.xpose.msra.mxu0 0.0
    %505 = vmatprep.subr.mxu0 0.0
    %506 = vmatpush1.xpose.msra.mxu0 0.0
    %507 = vmatprep.subr.mxu0 0.0
    %508 = vmatpush1.xpose.msra.mxu0 0.0
    %509 = vmatprep.subr.mxu0 0.0
    %510 = vmatpush1.xpose.msra.mxu0 0.0
    %511 = vmatprep.subr.mxu0 0.0
    %512 = vmatpush1.xpose.msra.mxu0 0.0
    %513 = vmatprep.mubr.f32.mxu0 %v447
    %514 = vmatmul.mubr.f32.gmra.mrb[0].mxu0 %v115
    %v515 = vpop.f32.mrb[0].mxu0
    %v516 = vadd.f32 0.0, %v515
    %v517 = vpop.f32.mrb[0].mxu0
    %518 = vdwg.mxu0
    %v520 = vcombine.high %v116, %v116
    %522 = vmatprep.subr.mxu0 %v176
    %523 = vmatpush1.xpose.msra.mxu0 %v175
    %524 = vmatprep.subr.mxu0 %v178
    %525 = vmatpush1.xpose.msra.mxu0 %v177
    %526 = vmatprep.subr.mxu0 %v180
    %527 = vmatpush1.xpose.msra.mxu0 %v179
    %528 = vmatprep.subr.mxu0 %v182
    %529 = vmatpush1.xpose.msra.mxu0 %v181
    %530 = vmatprep.subr.mxu0 0.0
    %531 = vmatpush1.xpose.msra.mxu0 0.0
    %532 = vmatprep.subr.mxu0 0.0
    %533 = vmatpush1.xpose.msra.mxu0 0.0
    %534 = vmatprep.subr.mxu0 0.0
    %535 = vmatpush1.xpose.msra.mxu0 0.0
    %536 = vmatprep.subr.mxu0 0.0
    %537 = vmatpush1.xpose.msra.mxu0 0.0
    %538 = vmatprep.subr.mxu0 0.0
    %539 = vmatpush1.xpose.msra.mxu0 0.0
    %540 = vmatprep.subr.mxu0 0.0
    %541 = vmatpush1.xpose.msra.mxu0 0.0
    %542 = vmatprep.subr.mxu0 0.0
    %543 = vmatpush1.xpose.msra.mxu0 0.0
    %544 = vmatprep.subr.mxu0 0.0
    %545 = vmatpush1.xpose.msra.mxu0 0.0
    %546 = vmatprep.subr.mxu0 0.0
    %547 = vmatpush1.xpose.msra.mxu0 0.0
    %548 = vmatprep.subr.mxu0 0.0
    %549 = vmatpush1.xpose.msra.mxu0 0.0
    %550 = vmatprep.subr.mxu0 0.0
    %551 = vmatpush1.xpose.msra.mxu0 0.0
    %552 = vmatprep.subr.mxu0 0.0
    %553 = vmatpush1.xpose.msra.mxu0 0.0
    %554 = vmatprep.subr.mxu0 0.0
    %555 = vmatpush1.xpose.msra.mxu0 0.0
    %556 = vmatprep.subr.mxu0 0.0
    %557 = vmatpush1.xpose.msra.mxu0 0.0
    %558 = vmatprep.subr.mxu0 0.0
    %559 = vmatpush1.xpose.msra.mxu0 0.0
    %560 = vmatprep.subr.mxu0 0.0
    %561 = vmatpush1.xpose.msra.mxu0 0.0
    %562 = vmatprep.subr.mxu0 0.0
    %563 = vmatpush1.xpose.msra.mxu0 0.0
    %564 = vmatprep.subr.mxu0 0.0
    %565 = vmatpush1.xpose.msra.mxu0 0.0
    %566 = vmatprep.subr.mxu0 0.0
    %567 = vmatpush1.xpose.msra.mxu0 0.0
    %568 = vmatprep.subr.mxu0 0.0
    %569 = vmatpush1.xpose.msra.mxu0 0.0
    %570 = vmatprep.subr.mxu0 0.0
    %571 = vmatpush1.xpose.msra.mxu0 0.0
    %572 = vmatprep.subr.mxu0 0.0
    %573 = vmatpush1.xpose.msra.mxu0 0.0
    %574 = vmatprep.subr.mxu0 0.0
    %575 = vmatpush1.xpose.msra.mxu0 0.0
    %576 = vmatprep.subr.mxu0 0.0
    %577 = vmatpush1.xpose.msra.mxu0 0.0
    %578 = vmatprep.subr.mxu0 0.0
    %579 = vmatpush1.xpose.msra.mxu0 0.0
    %580 = vmatprep.subr.mxu0 0.0
    %581 = vmatpush1.xpose.msra.mxu0 0.0
    %582 = vmatprep.subr.mxu0 0.0
    %583 = vmatpush1.xpose.msra.mxu0 0.0
    %584 = vmatprep.subr.mxu0 0.0
    %585 = vmatpush1.xpose.msra.mxu0 0.0
    %586 = vmatprep.mubr.f32.mxu0 %v520
    %587 = vmatmul.mubr.f32.gmra.mrb[0].mxu0 %v116
    %v588 = vpop.f32.mrb[0].mxu0
    %v589 = vadd.f32 0.0, %v588
    %v590 = vpop.f32.mrb[0].mxu0
    %591 = vdwg.mxu0
    %v592 = vmul.f32 %v370, 2.0
    %v593 = vmul.f32 %v443, 2.0
    %v594 = vmul.f32 %v516, 2.0
    %v595 = vmul.f32 %v589, 2.0
    %v596 = vsub.f32 %v204, %v592
    %v597 = vsub.f32 %v209, %v593
    %v598 = vsub.f32 %v214, %v594
    %v599 = vsub.f32 %v219, %v595
    %v616 = vlaneseq
    %v617 = vand.u32 %v616, 127
    %v618 = vlaneseq
    %v619 = vshrl.u32 %v618, 7
    %v620 = vsub.s32 %v617, %v619
    %v621 = vrot.slane %v254, %v620
    %v622 = vadd.s32 %v617, 4294967288
    %v623 = vlaneseq
    %v624 = vshrl.u32 %v623, 7
    %v625 = vsub.s32 %v622, %v624
    %v626 = vrot.slane %v257, %v625
    %vm627 = vcmask 130112
    %v628 = vsel %vm627, %v626, %v621
    %v629 = vadd.s32 %v617, 4294967280
    %v630 = vlaneseq
    %v631 = vshrl.u32 %v630, 7
    %v632 = vsub.s32 %v629, %v631
    %v633 = vrot.slane %v260, %v632
    %vm634 = vcmask 195712
    %v635 = vsel %vm634, %v633, %v628
    %v636 = vadd.s32 %v617, 4294967272
    %v637 = vlaneseq
    %v638 = vshrl.u32 %v637, 7
    %v639 = vsub.s32 %v636, %v638
    %v640 = vrot.slane %v263, %v639
    %vm641 = vcmask 261312
    %v642 = vsel %vm641, %v640, %v635
    %v643 = vlaneseq
    %v644 = vshrl.u32 %v643, 7
    %v645 = vsub.s32 %v617, %v644
    %v646 = vrot.slane %v266, %v645
    %v647 = vlaneseq
    %v648 = vshrl.u32 %v647, 7
    %v649 = vsub.s32 %v622, %v648
    %v650 = vrot.slane %v269, %v649
    %v651 = vsel %vm627, %v650, %v646
    %v652 = vlaneseq
    %v653 = vshrl.u32 %v652, 7
    %v654 = vsub.s32 %v629, %v653
    %v655 = vrot.slane %v272, %v654
    %v656 = vsel %vm634, %v655, %v651
    %v657 = vlaneseq
    %v658 = vshrl.u32 %v657, 7
    %v659 = vsub.s32 %v636, %v658
    %v660 = vrot.slane %v275, %v659
    %v661 = vsel %vm641, %v660, %v656
    %v662 = vlaneseq
    %v663 = vshrl.u32 %v662, 7
    %v664 = vsub.s32 %v617, %v663
    %v665 = vrot.slane %v278, %v664
    %v666 = vlaneseq
    %v667 = vshrl.u32 %v666, 7
    %v668 = vsub.s32 %v622, %v667
    %v669 = vrot.slane %v281, %v668
    %v670 = vsel %vm627, %v669, %v665
    %v671 = vlaneseq
    %v672 = vshrl.u32 %v671, 7
    %v673 = vsub.s32 %v629, %v672
    %v674 = vrot.slane %v284, %v673
    %v675 = vsel %vm634, %v674, %v670
    %v676 = vlaneseq
    %v677 = vshrl.u32 %v676, 7
    %v678 = vsub.s32 %v636, %v677
    %v679 = vrot.slane %v287, %v678
    %v680 = vsel %vm641, %v679, %v675
    %v681 = vlaneseq
    %v682 = vshrl.u32 %v681, 7
    %v683 = vsub.s32 %v617, %v682
    %v684 = vrot.slane %v290, %v683
    %v685 = vlaneseq
    %v686 = vshrl.u32 %v685, 7
    %v687 = vsub.s32 %v622, %v686
    %v688 = vrot.slane %v293, %v687
    %v689 = vsel %vm627, %v688, %v684
    %v690 = vlaneseq
    %v691 = vshrl.u32 %v690, 7
    %v692 = vsub.s32 %v629, %v691
    %v693 = vrot.slane %v296, %v692
    %v694 = vsel %vm634, %v693, %v689
    %v695 = vlaneseq
    %v696 = vshrl.u32 %v695, 7
    %v697 = vsub.s32 %v636, %v696
    %v698 = vrot.slane %v299, %v697
    %v699 = vsel %vm641, %v698, %v694
    %vm700 = vcmask 1041409
    %v705 = vadd.f32 %v596, %v642
    %v706 = vadd.f32 %v597, %v661
    %v707 = vadd.f32 %v598, %v680
    %v708 = vadd.f32 %v599, %v699
    %v709 = vmax.f32 %v705, -5.0
    %v710 = vmax.f32 %v706, -5.0
    %v711 = vmax.f32 %v707, -5.0
    %v712 = vmax.f32 %v708, -5.0
    %v713 = vmin.f32 %v709, 5.0
    %v714 = vmin.f32 %v710, 5.0
    %v715 = vmin.f32 %v711, 5.0
    %v716 = vmin.f32 %v712, 5.0
    %v717 = vsub.f32 0.0, %v713
    %v718 = vsub.f32 0.0, %v714
    %v719 = vsub.f32 0.0, %v715
    %v720 = vsub.f32 0.0, %v716
    %v721 = vmax.f32 %v141, 0.005
    %v722 = vmax.f32 %v149, 0.005
    %v723 = vmax.f32 %v148, 0.005
    %v724 = vmax.f32 %v150, 0.005
    %v725 = vmin.f32 %v721, 0.995
    %v726 = vmin.f32 %v722, 0.995
    %v727 = vmin.f32 %v723, 0.995
    %v728 = vmin.f32 %v724, 0.995
    %v729 = vlog2.pop %v725
    %v730 = vmul.f32 %v729, 0.6931472
    %v731 = vlog2.pop %v726
    %v732 = vmul.f32 %v731, 0.6931472
    %v733 = vlog2.pop %v727
    %v734 = vmul.f32 %v733, 0.6931472
    %v735 = vlog2.pop %v728
    %v736 = vmul.f32 %v735, 0.6931472
    %v737 = vsub.f32 0.0, %v730
    %v738 = vsub.f32 0.0, %v732
    %v739 = vsub.f32 0.0, %v734
    %v740 = vsub.f32 0.0, %v736
    %v741 = vlog2.pop %v737
    %v742 = vmul.f32 %v741, 0.6931472
    %v743 = vlog2.pop %v738
    %v744 = vmul.f32 %v743, 0.6931472
    %v745 = vlog2.pop %v739
    %v746 = vmul.f32 %v745, 0.6931472
    %v747 = vlog2.pop %v740
    %v748 = vmul.f32 %v747, 0.6931472
    %v749 = vsub.f32 0.0, %v742
    %v750 = vsub.f32 0.0, %v744
    %v751 = vsub.f32 0.0, %v746
    %v752 = vsub.f32 0.0, %v748
    %v753 = vadd.f32 %v717, %v749
    %v754 = vadd.f32 %v718, %v750
    %v755 = vadd.f32 %v719, %v751
    %v756 = vadd.f32 %v720, %v752
    %vm757 = vcmask 254976
    %v758 = vsel %vm757, %v753, -inf
    %759 = vmax.xlane.f32.xlu0 %v758
    %v760 = vpop.xlane.xlu0 %759
    %v761 = vsel %vm757, %v754, -inf
    %762 = vmax.xlane.f32.xlu0 %v761
    %v763 = vpop.xlane.xlu0 %762
    %v764 = vsel %vm757, %v755, -inf
    %765 = vmax.xlane.f32.xlu0 %v764
    %v766 = vpop.xlane.xlu0 %765
    %v767 = vsel %vm757, %v756, -inf
    %768 = vmax.xlane.f32.xlu0 %v767
    %v769 = vpop.xlane.xlu0 %768
    %vm770 = vcmp.eq.f32.partialorder %v753, %v760
    %vm771 = vcmp.eq.f32.partialorder %v754, %v763
    %vm772 = vcmp.eq.f32.partialorder %v755, %v766
    %vm773 = vcmp.eq.f32.partialorder %v756, %v769
    %v774 = vsel %vm770, %v617, 32
    %v775 = vsel %vm771, %v617, 32
    %v776 = vsel %vm772, %v617, 32
    %v777 = vsel %vm773, %v617, 32
    %v778 = vsel %vm757, %v774, 2147483647
    %v779 = vand.u32 %v778, 65535
    %v780 = vshra.s32 %v778, 16
    %v781 = vcvt.s32.f32 %v779
    %v782 = vcvt.s32.f32 %v780
    %783 = vmin.xlane.f32.xlu0 %v782
    %v784 = vpop.xlane.xlu0 %783
    %vm785 = vcmp.eq.f32.partialorder %v782, %v784
    %v786 = vsel %vm785, %v781, inf
    %787 = vmin.xlane.f32.xlu0 %v786
    %v788 = vpop.xlane.xlu0 %787
    %v789 = vcvt.f32.s32 %v788
    %v790 = vcvt.f32.s32 %v784
    %v791 = vshll.u32 %v790, 16
    %v792 = vadd.s32 %v791, %v789
    %v793 = vsel %vm757, %v775, 2147483647
    %v794 = vand.u32 %v793, 65535
    %v795 = vshra.s32 %v793, 16
    %v796 = vcvt.s32.f32 %v794
    %v797 = vcvt.s32.f32 %v795
    %798 = vmin.xlane.f32.xlu0 %v797
    %v799 = vpop.xlane.xlu0 %798
    %vm800 = vcmp.eq.f32.partialorder %v797, %v799
    %v801 = vsel %vm800, %v796, inf
    %802 = vmin.xlane.f32.xlu0 %v801
    %v803 = vpop.xlane.xlu0 %802
    %v804 = vcvt.f32.s32 %v803
    %v805 = vcvt.f32.s32 %v799
    %v806 = vshll.u32 %v805, 16
    %v807 = vadd.s32 %v806, %v804
    %v808 = vsel %vm757, %v776, 2147483647
    %v809 = vand.u32 %v808, 65535
    %v810 = vshra.s32 %v808, 16
    %v811 = vcvt.s32.f32 %v809
    %v812 = vcvt.s32.f32 %v810
    %813 = vmin.xlane.f32.xlu0 %v812
    %v814 = vpop.xlane.xlu0 %813
    %vm815 = vcmp.eq.f32.partialorder %v812, %v814
    %v816 = vsel %vm815, %v811, inf
    %817 = vmin.xlane.f32.xlu0 %v816
    %v818 = vpop.xlane.xlu0 %817
    %v819 = vcvt.f32.s32 %v818
    %v820 = vcvt.f32.s32 %v814
    %v821 = vshll.u32 %v820, 16
    %v822 = vadd.s32 %v821, %v819
    %v823 = vsel %vm757, %v777, 2147483647
    %v824 = vand.u32 %v823, 65535
    %v825 = vshra.s32 %v823, 16
    %v826 = vcvt.s32.f32 %v824
    %v827 = vcvt.s32.f32 %v825
    %828 = vmin.xlane.f32.xlu0 %v827
    %v829 = vpop.xlane.xlu0 %828
    %vm830 = vcmp.eq.f32.partialorder %v827, %v829
    %v831 = vsel %vm830, %v826, inf
    %832 = vmin.xlane.f32.xlu0 %v831
    %v833 = vpop.xlane.xlu0 %832
    %v834 = vcvt.f32.s32 %v833
    %v835 = vcvt.f32.s32 %v829
    %v836 = vshll.u32 %v835, 16
    %v837 = vadd.s32 %v836, %v834
    %vm838 = vcmp.eq.s32.totalorder %v617, %v792
    %vm839 = vcmp.eq.s32.totalorder %v617, %v807
    %vm840 = vcmp.eq.s32.totalorder %v617, %v822
    %vm841 = vcmp.eq.s32.totalorder %v617, %v837
    %v842 = vsel %vm838, 1.0, 0.0
    %v843 = vsel %vm839, 1.0, 0.0
    %v844 = vsel %vm840, 1.0, 0.0
    %v845 = vsel %vm841, 1.0, 0.0
    %vm846 = vcmask 261120
    %v848 = vsel %vm846, %v842, 0
    %850 = vmatprep.subr.mxu0 %v152
    %851 = vmatpush1.msra.mxu0 %v151
    %852 = vmatprep.subr.mxu0 %v154
    %853 = vmatpush1.msra.mxu0 %v153
    %854 = vmatprep.subr.mxu0 %v156
    %855 = vmatpush1.msra.mxu0 %v155
    %856 = vmatprep.subr.mxu0 %v158
    %857 = vmatpush1.msra.mxu0 %v157
    %858 = vmatprep.subr.mxu0 0.0
    %859 = vmatpush1.msra.mxu0 0.0
    %860 = vmatprep.subr.mxu0 0.0
    %861 = vmatpush1.msra.mxu0 0.0
    %862 = vmatprep.subr.mxu0 0.0
    %863 = vmatpush1.msra.mxu0 0.0
    %864 = vmatprep.subr.mxu0 0.0
    %865 = vmatpush1.msra.mxu0 0.0
    %866 = vmatprep.subr.mxu0 0.0
    %867 = vmatpush1.msra.mxu0 0.0
    %868 = vmatprep.subr.mxu0 0.0
    %869 = vmatpush1.msra.mxu0 0.0
    %870 = vmatprep.subr.mxu0 0.0
    %871 = vmatpush1.msra.mxu0 0.0
    %872 = vmatprep.subr.mxu0 0.0
    %873 = vmatpush1.msra.mxu0 0.0
    %874 = vmatprep.subr.mxu0 0.0
    %875 = vmatpush1.msra.mxu0 0.0
    %876 = vmatprep.subr.mxu0 0.0
    %877 = vmatpush1.msra.mxu0 0.0
    %878 = vmatprep.subr.mxu0 0.0
    %879 = vmatpush1.msra.mxu0 0.0
    %880 = vmatprep.subr.mxu0 0.0
    %881 = vmatpush1.msra.mxu0 0.0
    %882 = vmatprep.subr.mxu0 0.0
    %883 = vmatpush1.msra.mxu0 0.0
    %884 = vmatprep.subr.mxu0 0.0
    %885 = vmatpush1.msra.mxu0 0.0
    %886 = vmatprep.subr.mxu0 0.0
    %887 = vmatpush1.msra.mxu0 0.0
    %888 = vmatprep.subr.mxu0 0.0
    %889 = vmatpush1.msra.mxu0 0.0
    %890 = vmatprep.subr.mxu0 0.0
    %891 = vmatpush1.msra.mxu0 0.0
    %892 = vmatprep.subr.mxu0 0.0
    %893 = vmatpush1.msra.mxu0 0.0
    %894 = vmatprep.subr.mxu0 0.0
    %895 = vmatpush1.msra.mxu0 0.0
    %896 = vmatprep.subr.mxu0 0.0
    %897 = vmatpush1.msra.mxu0 0.0
    %898 = vmatprep.subr.mxu0 0.0
    %899 = vmatpush1.msra.mxu0 0.0
    %900 = vmatprep.subr.mxu0 0.0
    %901 = vmatpush1.msra.mxu0 0.0
    %902 = vmatprep.subr.mxu0 0.0
    %903 = vmatpush1.msra.mxu0 0.0
    %904 = vmatprep.subr.mxu0 0.0
    %905 = vmatpush1.msra.mxu0 0.0
    %906 = vmatprep.subr.mxu0 0.0
    %907 = vmatpush1.msra.mxu0 0.0
    %908 = vmatprep.subr.mxu0 0.0
    %909 = vmatpush1.msra.mxu0 0.0
    %910 = vmatprep.subr.mxu0 0.0
    %911 = vmatpush1.msra.mxu0 0.0
    %912 = vmatprep.subr.mxu0 0.0
    %913 = vmatpush1.msra.mxu0 0.0
    %914 = vmatprep.mubr.f32.mxu0 0.0
    %915 = vmatmul.mubr.f32.gmra.mrb[0].mxu0 %v848
    %v916 = vpop.f32.mrb[0].mxu0
    %v917 = vadd.f32 0.0, %v916
    %v918 = vpop.f32.mrb[0].mxu0
    %v919 = vadd.f32 0.0, %v918
    %920 = vdwg.mxu0
    %v922 = vsel %vm846, %v843, 0
    %924 = vmatprep.subr.mxu0 %v160
    %925 = vmatpush1.msra.mxu0 %v159
    %926 = vmatprep.subr.mxu0 %v162
    %927 = vmatpush1.msra.mxu0 %v161
    %928 = vmatprep.subr.mxu0 %v164
    %929 = vmatpush1.msra.mxu0 %v163
    %930 = vmatprep.subr.mxu0 %v166
    %931 = vmatpush1.msra.mxu0 %v165
    %932 = vmatprep.subr.mxu0 0.0
    %933 = vmatpush1.msra.mxu0 0.0
    %934 = vmatprep.subr.mxu0 0.0
    %935 = vmatpush1.msra.mxu0 0.0
    %936 = vmatprep.subr.mxu0 0.0
    %937 = vmatpush1.msra.mxu0 0.0
    %938 = vmatprep.subr.mxu0 0.0
    %939 = vmatpush1.msra.mxu0 0.0
    %940 = vmatprep.subr.mxu0 0.0
    %941 = vmatpush1.msra.mxu0 0.0
    %942 = vmatprep.subr.mxu0 0.0
    %943 = vmatpush1.msra.mxu0 0.0
    %944 = vmatprep.subr.mxu0 0.0
    %945 = vmatpush1.msra.mxu0 0.0
    %946 = vmatprep.subr.mxu0 0.0
    %947 = vmatpush1.msra.mxu0 0.0
    %948 = vmatprep.subr.mxu0 0.0
    %949 = vmatpush1.msra.mxu0 0.0
    %950 = vmatprep.subr.mxu0 0.0
    %951 = vmatpush1.msra.mxu0 0.0
    %952 = vmatprep.subr.mxu0 0.0
    %953 = vmatpush1.msra.mxu0 0.0
    %954 = vmatprep.subr.mxu0 0.0
    %955 = vmatpush1.msra.mxu0 0.0
    %956 = vmatprep.subr.mxu0 0.0
    %957 = vmatpush1.msra.mxu0 0.0
    %958 = vmatprep.subr.mxu0 0.0
    %959 = vmatpush1.msra.mxu0 0.0
    %960 = vmatprep.subr.mxu0 0.0
    %961 = vmatpush1.msra.mxu0 0.0
    %962 = vmatprep.subr.mxu0 0.0
    %963 = vmatpush1.msra.mxu0 0.0
    %964 = vmatprep.subr.mxu0 0.0
    %965 = vmatpush1.msra.mxu0 0.0
    %966 = vmatprep.subr.mxu0 0.0
    %967 = vmatpush1.msra.mxu0 0.0
    %968 = vmatprep.subr.mxu0 0.0
    %969 = vmatpush1.msra.mxu0 0.0
    %970 = vmatprep.subr.mxu0 0.0
    %971 = vmatpush1.msra.mxu0 0.0
    %972 = vmatprep.subr.mxu0 0.0
    %973 = vmatpush1.msra.mxu0 0.0
    %974 = vmatprep.subr.mxu0 0.0
    %975 = vmatpush1.msra.mxu0 0.0
    %976 = vmatprep.subr.mxu0 0.0
    %977 = vmatpush1.msra.mxu0 0.0
    %978 = vmatprep.subr.mxu0 0.0
    %979 = vmatpush1.msra.mxu0 0.0
    %980 = vmatprep.subr.mxu0 0.0
    %981 = vmatpush1.msra.mxu0 0.0
    %982 = vmatprep.subr.mxu0 0.0
    %983 = vmatpush1.msra.mxu0 0.0
    %984 = vmatprep.subr.mxu0 0.0
    %985 = vmatpush1.msra.mxu0 0.0
    %986 = vmatprep.subr.mxu0 0.0
    %987 = vmatpush1.msra.mxu0 0.0
    %988 = vmatprep.mubr.f32.mxu0 0.0
    %989 = vmatmul.mubr.f32.gmra.mrb[0].mxu0 %v922
    %v990 = vpop.f32.mrb[0].mxu0
    %v991 = vadd.f32 0.0, %v990
    %v992 = vpop.f32.mrb[0].mxu0
    %v993 = vadd.f32 0.0, %v992
    %994 = vdwg.mxu0
    %v996 = vsel %vm846, %v844, 0
    %998 = vmatprep.subr.mxu0 %v168
    %999 = vmatpush1.msra.mxu0 %v167
    %1000 = vmatprep.subr.mxu0 %v170
    %1001 = vmatpush1.msra.mxu0 %v169
    %1002 = vmatprep.subr.mxu0 %v172
    %1003 = vmatpush1.msra.mxu0 %v171
    %1004 = vmatprep.subr.mxu0 %v174
    %1005 = vmatpush1.msra.mxu0 %v173
    %1006 = vmatprep.subr.mxu0 0.0
    %1007 = vmatpush1.msra.mxu0 0.0
    %1008 = vmatprep.subr.mxu0 0.0
    %1009 = vmatpush1.msra.mxu0 0.0
    %1010 = vmatprep.subr.mxu0 0.0
    %1011 = vmatpush1.msra.mxu0 0.0
    %1012 = vmatprep.subr.mxu0 0.0
    %1013 = vmatpush1.msra.mxu0 0.0
    %1014 = vmatprep.subr.mxu0 0.0
    %1015 = vmatpush1.msra.mxu0 0.0
    %1016 = vmatprep.subr.mxu0 0.0
    %1017 = vmatpush1.msra.mxu0 0.0
    %1018 = vmatprep.subr.mxu0 0.0
    %1019 = vmatpush1.msra.mxu0 0.0
    %1020 = vmatprep.subr.mxu0 0.0
    %1021 = vmatpush1.msra.mxu0 0.0
    %1022 = vmatprep.subr.mxu0 0.0
    %1023 = vmatpush1.msra.mxu0 0.0
    %1024 = vmatprep.subr.mxu0 0.0
    %1025 = vmatpush1.msra.mxu0 0.0
    %1026 = vmatprep.subr.mxu0 0.0
    %1027 = vmatpush1.msra.mxu0 0.0
    %1028 = vmatprep.subr.mxu0 0.0
    %1029 = vmatpush1.msra.mxu0 0.0
    %1030 = vmatprep.subr.mxu0 0.0
    %1031 = vmatpush1.msra.mxu0 0.0
    %1032 = vmatprep.subr.mxu0 0.0
    %1033 = vmatpush1.msra.mxu0 0.0
    %1034 = vmatprep.subr.mxu0 0.0
    %1035 = vmatpush1.msra.mxu0 0.0
    %1036 = vmatprep.subr.mxu0 0.0
    %1037 = vmatpush1.msra.mxu0 0.0
    %1038 = vmatprep.subr.mxu0 0.0
    %1039 = vmatpush1.msra.mxu0 0.0
    %1040 = vmatprep.subr.mxu0 0.0
    %1041 = vmatpush1.msra.mxu0 0.0
    %1042 = vmatprep.subr.mxu0 0.0
    %1043 = vmatpush1.msra.mxu0 0.0
    %1044 = vmatprep.subr.mxu0 0.0
    %1045 = vmatpush1.msra.mxu0 0.0
    %1046 = vmatprep.subr.mxu0 0.0
    %1047 = vmatpush1.msra.mxu0 0.0
    %1048 = vmatprep.subr.mxu0 0.0
    %1049 = vmatpush1.msra.mxu0 0.0
    %1050 = vmatprep.subr.mxu0 0.0
    %1051 = vmatpush1.msra.mxu0 0.0
    %1052 = vmatprep.subr.mxu0 0.0
    %1053 = vmatpush1.msra.mxu0 0.0
    %1054 = vmatprep.subr.mxu0 0.0
    %1055 = vmatpush1.msra.mxu0 0.0
    %1056 = vmatprep.subr.mxu0 0.0
    %1057 = vmatpush1.msra.mxu0 0.0
    %1058 = vmatprep.subr.mxu0 0.0
    %1059 = vmatpush1.msra.mxu0 0.0
    %1060 = vmatprep.subr.mxu0 0.0
    %1061 = vmatpush1.msra.mxu0 0.0
    %1062 = vmatprep.mubr.f32.mxu0 0.0
    %1063 = vmatmul.mubr.f32.gmra.mrb[0].mxu0 %v996
    %v1064 = vpop.f32.mrb[0].mxu0
    %v1065 = vadd.f32 0.0, %v1064
    %v1066 = vpop.f32.mrb[0].mxu0
    %v1067 = vadd.f32 0.0, %v1066
    %1068 = vdwg.mxu0
    %v1070 = vsel %vm846, %v845, 0
    %1072 = vmatprep.subr.mxu0 %v176
    %1073 = vmatpush1.msra.mxu0 %v175
    %1074 = vmatprep.subr.mxu0 %v178
    %1075 = vmatpush1.msra.mxu0 %v177
    %1076 = vmatprep.subr.mxu0 %v180
    %1077 = vmatpush1.msra.mxu0 %v179
    %1078 = vmatprep.subr.mxu0 %v182
    %1079 = vmatpush1.msra.mxu0 %v181
    %1080 = vmatprep.subr.mxu0 0.0
    %1081 = vmatpush1.msra.mxu0 0.0
    %1082 = vmatprep.subr.mxu0 0.0
    %1083 = vmatpush1.msra.mxu0 0.0
    %1084 = vmatprep.subr.mxu0 0.0
    %1085 = vmatpush1.msra.mxu0 0.0
    %1086 = vmatprep.subr.mxu0 0.0
    %1087 = vmatpush1.msra.mxu0 0.0
    %1088 = vmatprep.subr.mxu0 0.0
    %1089 = vmatpush1.msra.mxu0 0.0
    %1090 = vmatprep.subr.mxu0 0.0
    %1091 = vmatpush1.msra.mxu0 0.0
    %1092 = vmatprep.subr.mxu0 0.0
    %1093 = vmatpush1.msra.mxu0 0.0
    %1094 = vmatprep.subr.mxu0 0.0
    %1095 = vmatpush1.msra.mxu0 0.0
    %1096 = vmatprep.subr.mxu0 0.0
    %1097 = vmatpush1.msra.mxu0 0.0
    %1098 = vmatprep.subr.mxu0 0.0
    %1099 = vmatpush1.msra.mxu0 0.0
    %1100 = vmatprep.subr.mxu0 0.0
    %1101 = vmatpush1.msra.mxu0 0.0
    %1102 = vmatprep.subr.mxu0 0.0
    %1103 = vmatpush1.msra.mxu0 0.0
    %1104 = vmatprep.subr.mxu0 0.0
    %1105 = vmatpush1.msra.mxu0 0.0
    %1106 = vmatprep.subr.mxu0 0.0
    %1107 = vmatpush1.msra.mxu0 0.0
    %1108 = vmatprep.subr.mxu0 0.0
    %1109 = vmatpush1.msra.mxu0 0.0
    %1110 = vmatprep.subr.mxu0 0.0
    %1111 = vmatpush1.msra.mxu0 0.0
    %1112 = vmatprep.subr.mxu0 0.0
    %1113 = vmatpush1.msra.mxu0 0.0
    %1114 = vmatprep.subr.mxu0 0.0
    %1115 = vmatpush1.msra.mxu0 0.0
    %1116 = vmatprep.subr.mxu0 0.0
    %1117 = vmatpush1.msra.mxu0 0.0
    %1118 = vmatprep.subr.mxu0 0.0
    %1119 = vmatpush1.msra.mxu0 0.0
    %1120 = vmatprep.subr.mxu0 0.0
    %1121 = vmatpush1.msra.mxu0 0.0
    %1122 = vmatprep.subr.mxu0 0.0
    %1123 = vmatpush1.msra.mxu0 0.0
    %1124 = vmatprep.subr.mxu0 0.0
    %1125 = vmatpush1.msra.mxu0 0.0
    %1126 = vmatprep.subr.mxu0 0.0
    %1127 = vmatpush1.msra.mxu0 0.0
    %1128 = vmatprep.subr.mxu0 0.0
    %1129 = vmatpush1.msra.mxu0 0.0
    %1130 = vmatprep.subr.mxu0 0.0
    %1131 = vmatpush1.msra.mxu0 0.0
    %1132 = vmatprep.subr.mxu0 0.0
    %1133 = vmatpush1.msra.mxu0 0.0
    %1134 = vmatprep.subr.mxu0 0.0
    %1135 = vmatpush1.msra.mxu0 0.0
    %1136 = vmatprep.mubr.f32.mxu0 0.0
    %1137 = vmatmul.mubr.f32.gmra.mrb[0].mxu0 %v1070
    %v1138 = vpop.f32.mrb[0].mxu0
    %v1139 = vadd.f32 0.0, %v1138
    %v1140 = vpop.f32.mrb[0].mxu0
    %v1141 = vadd.f32 0.0, %v1140
    %1142 = vdwg.mxu0
    %v1143 = vcombine.low %v917, %v1065
    %v1145 = vunpack.c.l.s4 1983009808
    %v1146 = vunpack.c.0.s8 %v1145
    %v1147 = vlaneseq
    %v1148 = vshrl.u32 %v1147, 7
    %v1149 = vsub.s32 %v1146, %v1148
    %v1150 = vrot.slane %v1143, %v1149
    %v1151 = vcombine.low %v991, %v1139
    %v1153 = vunpack.c.l.s4 1983009808
    %v1154 = vunpack.c.0.s8 %v1153
    %v1155 = vlaneseq
    %v1156 = vshrl.u32 %v1155, 7
    %v1157 = vsub.s32 %v1154, %v1156
    %v1158 = vrot.slane %v1151, %v1157
    %v1159 = vcombine.low %v1150, %v1158
    %v1161 = vunpack.c.l.s4 1934713408
    %v1162 = vunpack.c.0.s8 %v1161
    %v1163 = vlaneseq
    %v1164 = vshrl.u32 %v1163, 7
    %v1165 = vsub.s32 %v1162, %v1164
    %v1166 = vrot.slane %v1159, %v1165
    %v1167 = vcombine.high %v1166, 0.0
    %v1168 = vcombine.low %v919, %v1067
    %v1170 = vunpack.c.l.s4 1983009808
    %v1171 = vunpack.c.0.s8 %v1170
    %v1172 = vlaneseq
    %v1173 = vshrl.u32 %v1172, 7
    %v1174 = vsub.s32 %v1171, %v1173
    %v1175 = vrot.slane %v1168, %v1174
    %v1176 = vcombine.low %v993, %v1141
    %v1178 = vunpack.c.l.s4 1983009808
    %v1179 = vunpack.c.0.s8 %v1178
    %v1180 = vlaneseq
    %v1181 = vshrl.u32 %v1180, 7
    %v1182 = vsub.s32 %v1179, %v1181
    %v1183 = vrot.slane %v1176, %v1182
    %v1184 = vcombine.low %v1175, %v1183
    %v1186 = vunpack.c.l.s4 1934713408
    %v1187 = vunpack.c.0.s8 %v1186
    %v1188 = vlaneseq
    %v1189 = vshrl.u32 %v1188, 7
    %v1190 = vsub.s32 %v1187, %v1189
    %v1191 = vrot.slane %v1184, %v1190
    %v1192 = vcombine.high %v1191, 0.0
    %v1197 = vcombine.low %v1166, %v1191
    %v1198 = vcombine.low %v1167, %v1192
    %1201 = vst [vmem:[#allocation8] sm:$0xff] %v1197
    %1202 = vst [vmem:[#allocation8 + $0x8] sm:$0xff] %v1198
    %v1203 = vlaneseq
    %v1204 = vshrl.u32 %v1203, 7
    %v1205 = vsub.s32 %v617, %v1204
    %v1206 = vrot.slane %v792, %v1205
    %v1207 = vlaneseq
    %v1208 = vshrl.u32 %v1207, 7
    %v1209 = vsub.s32 %v617, %v1208
    %v1210 = vrot.slane %v807, %v1209
    %v1211 = vlaneseq
    %v1212 = vshrl.u32 %v1211, 7
    %v1213 = vsub.s32 %v617, %v1212
    %v1214 = vrot.slane %v822, %v1213
    %v1215 = vlaneseq
    %v1216 = vshrl.u32 %v1215, 7
    %v1217 = vsub.s32 %v617, %v1216
    %v1218 = vrot.slane %v837, %v1217
    %v1219 = vsel %vm700, %v1210, %v1206
    %vm1220 = vcmask 1042434
    %v1221 = vsel %vm1220, %v1214, %v1219
    %vm1222 = vcmask 1043459
    %v1223 = vsel %vm1222, %v1218, %v1221
    %vm1224 = vcmask 11264
    %1225 = vst.msk [vmem:[%s5] sm:$0xf] %vm1224, %v1223
    // Predicated region
    $region26: #{tpu_custom_call.1} parent=1 // pred_check
      _
    $region27: #{tpu_custom_call.1} parent=1 // pred_check_branch
      %1227 = sbr.rel (0) target = $region29
    $region28: #{tpu_custom_call.1} parent=1 // pred_region
      %s1229 = ssub.s32 256, 256
      %1230 = vsyncadd [#allocation5], %s1229
      %s1231 = sshll.u32 [#allocation8], 4
      %s1232 = int_to_ptr.vmem [resolvable:$true] %s1231
      %1237 = dma.vmem_to_hbm [thread:$0]  %s1232, 256, %s4, [#allocation5], 128, 128, 8
    $region29: #{tpu_custom_call.1} parent=1 // pred_fallthru
      _
    // Predicated region
    $region30: #{tpu_custom_call.1} parent=1 // pred_check
      _
    $region31: #{tpu_custom_call.1} parent=1 // pred_check_branch
      %1239 = sbr.rel (0) target = $region33
    $region32: #{tpu_custom_call.1} parent=1 // pred_region
      _
    $region33: #{tpu_custom_call.1} parent=1 // pred_fallthru
      _
    // Predicated region
    $region34: #{tpu_custom_call.1} parent=1 // pred_check
      _
    $region35: #{tpu_custom_call.1} parent=1 // pred_check_branch
      %1241 = sbr.rel (0) target = $region37
    $region36: #{tpu_custom_call.1} parent=1 // pred_region
      %1242 = dma.done [#allocation5], 256
    $region37: #{tpu_custom_call.1} parent=1 // pred_fallthru
      _
    // Predicated region
    $region38: #{tpu_custom_call.1} parent=1 // pred_check
      _
    $region39: #{tpu_custom_call.1} parent=1 // pred_check_branch
      %1244 = sbr.rel (0) target = $region41
    $region40: #{tpu_custom_call.1} parent=1 // pred_region
      _
    $region41: #{tpu_custom_call.1} parent=1 // pred_fallthru
      _
    %1245 = vsyncpa [#allocation4], 1
    %1246 = vsyncpa [#allocation7], 1
    %1247 = vsyncpa [#allocation5], 1

</llo_original>
